<compile_context>
chip_gen: v7x
topology: tpu7x:2x2x1
jax: 0.10.0
libtpu: 0.0.40
codegen_flags: <defaults>
</compile_context>

<pallas_src>
import jax
import jax.numpy as jnp
from jax.experimental import pallas as pl
from jax.experimental.pallas import tpu as pltpu

IN = 64                      # input features
H1, H2, OUT = 150, 100, 4    # logical (PyTorch) layer sizes
H1P, H2P = 256, 128          # zero-padded hidden dims (lane-dense, 128-mult)


def _round_up(n, m):
    return ((n + m - 1) // m) * m


def dqn_kernel(x_ref, w1_ref, b1_ref, w2_ref, b2_ref, w3_ref, b3_ref, o_ref):
    # Layer 1: Linear(64 -> 256pad) + bias + ReLU  (bf16 operands, f32 accum)
    x = x_ref[...].astype(jnp.bfloat16)
    h1 = jnp.dot(x, w1_ref[...], preferred_element_type=jnp.float32)
    h1 = jnp.maximum(h1 + b1_ref[...], 0.0)
    # Layer 2: Linear(256pad -> 128pad) + bias + ReLU
    h2 = jnp.dot(h1.astype(jnp.bfloat16), w2_ref[...],
                 preferred_element_type=jnp.float32)
    h2 = jnp.maximum(h2 + b2_ref[...], 0.0)
    # Layer 3: Linear(128pad -> 4), no activation.  Only the 4 real logits are
    # ever computed or stored (narrow w3/b3 + narrow out block).
    out = jnp.dot(h2.astype(jnp.bfloat16), w3_ref[...],
                  preferred_element_type=jnp.float32)
    o_ref[...] = (out + b3_ref[...]).astype(o_ref.dtype)


def dqn_forward(x, params, *, block_b=1024):
    """x: (B, 64) float32.  params: padded (w1,b1,w2,b2,w3,b3).  Returns (B, 4)."""
    w1, b1, w2, b2, w3, b3 = params
    B = x.shape[0]
    # Batch tile: multiple of the f32 sublane tile (8), capped at block_b, and
    # small enough that any batch larger than one sublane tile yields >=2 grid
    # steps (keeps both TensorCores busy on v7x via "parallel" semantics).
    TB = max(8, min(block_b, _round_up(pl.cdiv(B, 2), 8)))
    grid = (pl.cdiv(B, TB),)   # ragged last tile allowed: OOB rows are masked

    def x_map(i):
        return (i, 0)

    def const_map(i):
        return (0, 0)

    out = pl.pallas_call(
        dqn_kernel,
        out_shape=jax.ShapeDtypeStruct((B, OUT), jnp.float32),
        grid=grid,
        in_specs=[
            pl.BlockSpec((TB, IN), x_map),            # x: pipelined per tile
            pl.BlockSpec((IN, H1P), const_map),       # weights: VMEM-resident
            pl.BlockSpec((1, H1P), const_map),
            pl.BlockSpec((H1P, H2P), const_map),
            pl.BlockSpec((1, H2P), const_map),
            pl.BlockSpec((H2P, OUT), const_map),      # only 4 real columns
            pl.BlockSpec((1, OUT), const_map),
        ],
        out_specs=pl.BlockSpec((TB, OUT), x_map),     # narrow (TB, 4) store
        compiler_params=pltpu.CompilerParams(
            dimension_semantics=("parallel",)),
    )(x, w1, b1, w2, b2, w3, b3)
    return out


def init_params(key):
    """PyTorch nn.Linear-style init U(-1/sqrt(fan_in), 1/sqrt(fan_in)),
    zero-padded to lane-dense shapes; weights stored bf16, biases f32.
    Layer 3 keeps its real 4 output columns (only the input rows are padded)."""
    dims = [(IN, H1, H1P), (H1, H2, H2P), (H2, OUT, OUT)]
    pad_in = [IN, H1P, H2P]   # padded fan-in of each layer's weight matrix
    params = []
    for (fan_in, fan_out, fan_out_pad), fan_in_pad in zip(dims, pad_in):
        key, kw, kb = jax.random.split(key, 3)
        bound = 1.0 / jnp.sqrt(float(fan_in))
        w = jax.random.uniform(kw, (fan_in, fan_out), jnp.float32, -bound, bound)
        b = jax.random.uniform(kb, (1, fan_out), jnp.float32, -bound, bound)
        # Zero-pad: extra input rows multiply zero activations, extra output
        # columns produce exact zeros (ReLU(0)=0), so semantics are preserved.
        w_p = jnp.zeros((fan_in_pad, fan_out_pad), jnp.float32)
        w_p = w_p.at[:fan_in, :fan_out].set(w)
        b_p = jnp.zeros((1, fan_out_pad), jnp.float32)
        b_p = b_p.at[:, :fan_out].set(b)
        params.extend([w_p.astype(jnp.bfloat16), b_p])
    return tuple(params)


def reference_forward_f32(x, params):
    """Pure-f32 reference on the un-padded slices (PyTorch semantics,
    modulo weights having been quantized to bf16 at init)."""
    w1, b1, w2, b2, w3, b3 = params
    w1 = w1[:IN, :H1].astype(jnp.float32)
    w2 = w2[:H1, :H2].astype(jnp.float32)
    w3 = w3[:H2, :OUT].astype(jnp.float32)
    h1 = jnp.maximum(x @ w1 + b1[:, :H1], 0.0)
    h2 = jnp.maximum(h1 @ w2 + b2[:, :H2], 0.0)
    return h2 @ w3 + b3[:, :OUT]


def reference_forward_matched(x, params):
    """Reference with the same bf16-operand / f32-accum matmuls as the kernel."""
    w1, b1, w2, b2, w3, b3 = params
    h1 = jnp.maximum(
        jnp.dot(x.astype(jnp.bfloat16), w1, preferred_element_type=jnp.float32) + b1, 0.0)
    h2 = jnp.maximum(
        jnp.dot(h1.astype(jnp.bfloat16), w2, preferred_element_type=jnp.float32) + b2, 0.0)
    out = jnp.dot(h2.astype(jnp.bfloat16), w3, preferred_element_type=jnp.float32) + b3
    return out


if __name__ == "__main__":
    key = jax.random.PRNGKey(0)
    key, kx = jax.random.split(key)

    B = 32  # small demo batch; yields a 2-step grid (TB=16) and exercises tiling
    x = jax.random.normal(kx, (B, IN), dtype=jnp.float32)
    params = init_params(key)

    out = dqn_forward(x, params)
    out = jax.block_until_ready(out)
    assert out.shape == (B, OUT)

    # Tight check vs a reference using identical bf16-operand matmuls.
    ref_matched = reference_forward_matched(x, params)
    assert jnp.allclose(out, ref_matched, atol=2e-3, rtol=2e-3)

    # Loose check vs the f32 PyTorch-equivalent forward (bf16-quantized weights).
    ref_f32 = reference_forward_f32(x, params)
    assert jnp.allclose(out, ref_f32, atol=5e-2, rtol=5e-2)

    print("KERNEL_OK")
</pallas_src>

<mosaic_0001>
module attributes {stable_mosaic.version = 11 : i64} {
  func.func @dqn_kernel(%arg0: i32, %arg1: memref<16x64xf32, #tpu.memory_space<vmem>>, %arg2: memref<64x256xbf16, #tpu.memory_space<vmem>>, %arg3: memref<1x256xf32, #tpu.memory_space<vmem>>, %arg4: memref<256x128xbf16, #tpu.memory_space<vmem>>, %arg5: memref<1x128xf32, #tpu.memory_space<vmem>>, %arg6: memref<128x4xbf16, #tpu.memory_space<vmem>>, %arg7: memref<1x4xf32, #tpu.memory_space<vmem>>, %arg8: memref<16x4xf32, #tpu.memory_space<vmem>>) attributes {dimension_semantics = [#tpu.dimension_semantics<parallel>], iteration_bounds = array<i64: 2>, scalar_prefetch = 0 : i64, scratch_operands = 0 : i64, tpu.core_type = #tpu.core_type<tc>, window_params = [{transform_indices = @transform_0, window_bounds = array<i64: 16, 64>}, {pipeline_mode = #tpu.pipeline_mode<synchronous>, transform_indices = @transform_1, window_bounds = array<i64: 64, 256>}, {pipeline_mode = #tpu.pipeline_mode<synchronous>, transform_indices = @transform_2, window_bounds = array<i64: 1, 256>}, {pipeline_mode = #tpu.pipeline_mode<synchronous>, transform_indices = @transform_3, window_bounds = array<i64: 256, 128>}, {pipeline_mode = #tpu.pipeline_mode<synchronous>, transform_indices = @transform_4, window_bounds = array<i64: 1, 128>}, {pipeline_mode = #tpu.pipeline_mode<synchronous>, transform_indices = @transform_5, window_bounds = array<i64: 128, 4>}, {pipeline_mode = #tpu.pipeline_mode<synchronous>, transform_indices = @transform_6, window_bounds = array<i64: 1, 4>}, {transform_indices = @transform_7, window_bounds = array<i64: 16, 4>}]} {
    %c0 = arith.constant 0 : index
    %c0_0 = arith.constant 0 : index
    %0 = vector.load %arg1[%c0, %c0_0] : memref<16x64xf32, #tpu.memory_space<vmem>>, vector<16x64xf32>
    %1 = arith.truncf %0 : vector<16x64xf32> to vector<16x64xbf16>
    %c0_1 = arith.constant 0 : index
    %c0_2 = arith.constant 0 : index
    %2 = vector.load %arg2[%c0_1, %c0_2] : memref<64x256xbf16, #tpu.memory_space<vmem>>, vector<64x256xbf16>
    %cst = arith.constant dense<0.000000e+00> : vector<16x256xf32>
    %3 = tpu.matmul %1, %2, %cst {dimension_numbers = #tpu.dot_dimension_numbers<[1], [0], [0], [1], [0, 0, 1, 1], [], []>} : vector<16x64xbf16>, vector<64x256xbf16>, vector<16x256xf32> -> vector<16x256xf32>
    %c0_3 = arith.constant 0 : index
    %c0_4 = arith.constant 0 : index
    %4 = vector.load %arg3[%c0_3, %c0_4] : memref<1x256xf32, #tpu.memory_space<vmem>>, vector<1x256xf32>
    %5 = vector.broadcast %4 : vector<1x256xf32> to vector<16x256xf32>
    %6 = arith.addf %3, %5 : vector<16x256xf32>
    %cst_5 = arith.constant 0.000000e+00 : f32
    %7 = vector.broadcast %cst_5 : f32 to vector<16x256xf32>
    %8 = arith.maximumf %6, %7 : vector<16x256xf32>
    %9 = arith.truncf %8 : vector<16x256xf32> to vector<16x256xbf16>
    %c0_6 = arith.constant 0 : index
    %c0_7 = arith.constant 0 : index
    %10 = vector.load %arg4[%c0_6, %c0_7] : memref<256x128xbf16, #tpu.memory_space<vmem>>, vector<256x128xbf16>
    %cst_8 = arith.constant dense<0.000000e+00> : vector<16x128xf32>
    %11 = tpu.matmul %9, %10, %cst_8 {dimension_numbers = #tpu.dot_dimension_numbers<[1], [0], [0], [1], [0, 0, 1, 1], [], []>} : vector<16x256xbf16>, vector<256x128xbf16>, vector<16x128xf32> -> vector<16x128xf32>
    %c0_9 = arith.constant 0 : index
    %c0_10 = arith.constant 0 : index
    %12 = vector.load %arg5[%c0_9, %c0_10] : memref<1x128xf32, #tpu.memory_space<vmem>>, vector<1x128xf32>
    %13 = vector.broadcast %12 : vector<1x128xf32> to vector<16x128xf32>
    %14 = arith.addf %11, %13 : vector<16x128xf32>
    %cst_11 = arith.constant 0.000000e+00 : f32
    %15 = vector.broadcast %cst_11 : f32 to vector<16x128xf32>
    %16 = arith.maximumf %14, %15 : vector<16x128xf32>
    %17 = arith.truncf %16 : vector<16x128xf32> to vector<16x128xbf16>
    %c0_12 = arith.constant 0 : index
    %c0_13 = arith.constant 0 : index
    %18 = vector.load %arg6[%c0_12, %c0_13] : memref<128x4xbf16, #tpu.memory_space<vmem>>, vector<128x4xbf16>
    %cst_14 = arith.constant dense<0.000000e+00> : vector<16x4xf32>
    %19 = tpu.matmul %17, %18, %cst_14 {dimension_numbers = #tpu.dot_dimension_numbers<[1], [0], [0], [1], [0, 0, 1, 1], [], []>} : vector<16x128xbf16>, vector<128x4xbf16>, vector<16x4xf32> -> vector<16x4xf32>
    %c0_15 = arith.constant 0 : index
    %c0_16 = arith.constant 0 : index
    %20 = vector.load %arg7[%c0_15, %c0_16] : memref<1x4xf32, #tpu.memory_space<vmem>>, vector<1x4xf32>
    %21 = vector.broadcast %20 : vector<1x4xf32> to vector<16x4xf32>
    %22 = arith.addf %19, %21 : vector<16x4xf32>
    %c0_17 = arith.constant 0 : index
    %c0_18 = arith.constant 0 : index
    %23 = vector.load %arg8[%c0_17, %c0_18] : memref<16x4xf32, #tpu.memory_space<vmem>>, vector<16x4xf32>
    tpu.vector_store %arg8[%c0_17, %c0_18], %22 {strides = array<i32>} : memref<16x4xf32, #tpu.memory_space<vmem>>, vector<16x4xf32>,
    return
  }
  func.func @transform_0(%arg0: i32) -> (i32, i32) {
    %c0_i32 = arith.constant 0 : i32
    %c0_i32_0 = arith.constant 0 : i32
    return %arg0, %c0_i32 : i32, i32
  }
  func.func @transform_1(%arg0: i32) -> (i32, i32) {
    %c0_i32 = arith.constant 0 : i32
    %c0_i32_0 = arith.constant 0 : i32
    %c0_i32_1 = arith.constant 0 : i32
    return %c0_i32, %c0_i32_0 : i32, i32
  }
  func.func @transform_2(%arg0: i32) -> (i32, i32) {
    %c0_i32 = arith.constant 0 : i32
    %c0_i32_0 = arith.constant 0 : i32
    %c0_i32_1 = arith.constant 0 : i32
    return %c0_i32, %c0_i32_0 : i32, i32
  }
  func.func @transform_3(%arg0: i32) -> (i32, i32) {
    %c0_i32 = arith.constant 0 : i32
    %c0_i32_0 = arith.constant 0 : i32
    %c0_i32_1 = arith.constant 0 : i32
    return %c0_i32, %c0_i32_0 : i32, i32
  }
  func.func @transform_4(%arg0: i32) -> (i32, i32) {
    %c0_i32 = arith.constant 0 : i32
    %c0_i32_0 = arith.constant 0 : i32
    %c0_i32_1 = arith.constant 0 : i32
    return %c0_i32, %c0_i32_0 : i32, i32
  }
  func.func @transform_5(%arg0: i32) -> (i32, i32) {
    %c0_i32 = arith.constant 0 : i32
    %c0_i32_0 = arith.constant 0 : i32
    %c0_i32_1 = arith.constant 0 : i32
    return %c0_i32, %c0_i32_0 : i32, i32
  }
  func.func @transform_6(%arg0: i32) -> (i32, i32) {
    %c0_i32 = arith.constant 0 : i32
    %c0_i32_0 = arith.constant 0 : i32
    %c0_i32_1 = arith.constant 0 : i32
    return %c0_i32, %c0_i32_0 : i32, i32
  }
  func.func @transform_7(%arg0: i32) -> (i32, i32) {
    %c0_i32 = arith.constant 0 : i32
    %c0_i32_0 = arith.constant 0 : i32
    return %arg0, %c0_i32 : i32, i32
  }
}

</mosaic_0001>

<llo_original>
// kernel: tpu_custom_call.1
$region0: #{tpu_custom_call.1}
  #allocation0 [shape = 'u32[]', space=smem, size = 0x4, offset = 0x4, fixed_abs, tag = 'smem constant byte address 0x4 - core index']
  #allocation1 [shape = 'u32[144,128]{1,0:T(1,128)}', space=vmem, size = 0x12000, scoped, tag = 'internal scratch']
  %s0 = inlined_call_operand.hbm [shape: f32[32,64], index: 0, kind: input, shape index: {}]
  %s1 = inlined_call_operand.vmem [shape: bf16[64,256], index: 1, kind: input, shape index: {}]
  %s2 = inlined_call_operand.vmem [shape: f32[1,256], index: 2, kind: input, shape index: {}]
  %s3 = inlined_call_operand.hbm [shape: bf16[256,128], index: 3, kind: input, shape index: {}]
  %s4 = inlined_call_operand.vmem [shape: f32[1,128], index: 4, kind: input, shape index: {}]
  %s5 = inlined_call_operand.vmem [shape: bf16[128,4], index: 5, kind: input, shape index: {}]
  %s6 = inlined_call_operand.vmem [shape: f32[1,4], index: 6, kind: input, shape index: {}]
  %s7 = inlined_call_operand.vmem [shape: f32[32,4], index: 7, kind: output, shape index: {}]
  %s8 = sld [smem:[#allocation0]]
  $region69: #{tpu_custom_call.1} parent=0
    _
  %s10 = ssub.s32 1, %s8
  %s11 = scalar_select 0, %s10, %s8
  $region1: #{tpu_custom_call.1} parent=0
    #allocation2 [shape = 'u8[16384]{0}', space=vmem, size = 0x4000, scoped, tag = 'input window, operand 0']
    #allocation3 [shape = 's32[2]{0}', space=sflag, size = 0x8, scoped, tag = 'scoped memory for tpu_custom_call.1']
    #allocation4 [shape = 'u8[65536]{0}', space=vmem, size = 0x10000, scoped, tag = 'input window, operand 3, single buffered']
    #allocation5 [shape = 's32[1]{0}', space=sflag, size = 0x4, scoped, tag = 'scoped memory for tpu_custom_call.1']
    %12 = vsyncpa [#allocation3], 0
    %s13 = scalar_lea.sflag [#allocation3], 1
    %14 = vsyncpa %s13, 0
    %15 = vsyncpa [#allocation5], 0
    loop: start=0, step=1, limit=4
    $region2: #{tpu_custom_call.1} parent=1 // loop_pre_header
      _
    $region3: #{tpu_custom_call.1} parent=1 // loop_header
      %s17 = sphi 0, %s21
      %p18 = scmp.ge.s32.totalorder %s17, 4
      %s27 = sphi 0, %s29
      %s30 = sphi 0, %s27
      %s31 = sphi 0, %s30
      %s47 = sphi 0, %s31
      %s51 = sphi 0, %s51
      %s53 = sphi 0, %s51
      %s54 = sphi 0, %s53
      %s68 = sphi 0, %s54
      %s72 = sphi 0, %s72
      %s74 = sphi 0, %s72
      %s75 = sphi 0, %s74
      %s89 = sphi 0, %s75
      %s93 = sphi 0, %s93
      %s95 = sphi 0, %s93
      %s96 = sphi 0, %s95
      %s110 = sphi 0, %s96
      %s114 = sphi 0, %s114
      %s116 = sphi 0, %s114
      %s117 = sphi 0, %s116
      %s131 = sphi 0, %s117
      %s135 = sphi 0, %s135
      %s137 = sphi 0, %s135
      %s138 = sphi 0, %s137
      %s152 = sphi 0, %s138
      %s156 = sphi 0, %s156
      %s158 = sphi 0, %s156
      %s159 = sphi 0, %s158
      %s173 = sphi 0, %s159
      %s179 = sphi 0, %s181
      %s182 = sphi 0, %s179
      %s183 = sphi 0, %s182
      %s199 = sphi 0, %s183
    $region4: #{tpu_custom_call.1} parent=1 // loop_header_branch
      %20 = sbr.rel (%p18) target = $region8
    $region5: #{tpu_custom_call.1} parent=1 // loop_body
      %s22 = ssub.s32 %s17, 1
      %s23 = ssub.s32 %s17, 2
      %s24 = sadd.s32 %s17, 1
      %s25 = ssub.s32 %s17, %s24
      %p26 = scmp.eq.s32.totalorder %s25, 0
      %s28 = sadd.s32 %s27, 1
      %s29 = scalar_select %p26, %s27, %s28
      %p32 = pneg %p26
      %p33 = scmp.eq.s32.totalorder %s17, 1
      %p34 = por %p32, %p33
      %p35 = scmp.ne.s32.totalorder %s27, %s30
      %p36 = scmp.eq.s32.totalorder %s17, 0
      %p37 = por %p35, %p36
      %p38 = scmp.ne.s32.totalorder %s27, %s30
      %p39 = scmp.eq.s32.totalorder %s22, 1
      %p40 = por %p38, %p39
      %p41 = scmp.ne.s32.totalorder %s30, %s31
      %p42 = scmp.eq.s32.totalorder %s22, 0
      %p43 = por %p41, %p42
      %p44 = scmp.ne.s32.totalorder %s30, %s31
      %p45 = scmp.eq.s32.totalorder %s23, 1
      %p46 = por %p44, %p45
      %p48 = scmp.ne.s32.totalorder %s31, %s47
      %p49 = scmp.eq.s32.totalorder %s23, 0
      %p50 = por %p48, %p49
      %s52 = sadd.s32 %s51, 1
      %p55 = scmp.eq.s32.totalorder %s17, 1
      %p56 = scmp.ne.s32.totalorder %s51, %s53
      %p57 = scmp.eq.s32.totalorder %s17, 0
      %p58 = por %p56, %p57
      %p59 = scmp.ne.s32.totalorder %s51, %s53
      %p60 = scmp.eq.s32.totalorder %s22, 1
      %p61 = por %p59, %p60
      %p62 = scmp.ne.s32.totalorder %s53, %s54
      %p63 = scmp.eq.s32.totalorder %s22, 0
      %p64 = por %p62, %p63
      %p65 = scmp.ne.s32.totalorder %s53, %s54
      %p66 = scmp.eq.s32.totalorder %s23, 1
      %p67 = por %p65, %p66
      %p69 = scmp.ne.s32.totalorder %s54, %s68
      %p70 = scmp.eq.s32.totalorder %s23, 0
      %p71 = por %p69, %p70
      %s73 = sadd.s32 %s72, 1
      %p76 = scmp.eq.s32.totalorder %s17, 1
      %p77 = scmp.ne.s32.totalorder %s72, %s74
      %p78 = scmp.eq.s32.totalorder %s17, 0
      %p79 = por %p77, %p78
      %p80 = scmp.ne.s32.totalorder %s72, %s74
      %p81 = scmp.eq.s32.totalorder %s22, 1
      %p82 = por %p80, %p81
      %p83 = scmp.ne.s32.totalorder %s74, %s75
      %p84 = scmp.eq.s32.totalorder %s22, 0
      %p85 = por %p83, %p84
      %p86 = scmp.ne.s32.totalorder %s74, %s75
      %p87 = scmp.eq.s32.totalorder %s23, 1
      %p88 = por %p86, %p87
      %p90 = scmp.ne.s32.totalorder %s75, %s89
      %p91 = scmp.eq.s32.totalorder %s23, 0
      %p92 = por %p90, %p91
      %s94 = sadd.s32 %s93, 1
      %p97 = scmp.eq.s32.totalorder %s17, 1
      %p98 = scmp.ne.s32.totalorder %s93, %s95
      %p99 = scmp.eq.s32.totalorder %s17, 0
      %p100 = por %p98, %p99
      %p101 = scmp.ne.s32.totalorder %s93, %s95
      %p102 = scmp.eq.s32.totalorder %s22, 1
      %p103 = por %p101, %p102
      %p104 = scmp.ne.s32.totalorder %s95, %s96
      %p105 = scmp.eq.s32.totalorder %s22, 0
      %p106 = por %p104, %p105
      %p107 = scmp.ne.s32.totalorder %s95, %s96
      %p108 = scmp.eq.s32.totalorder %s23, 1
      %p109 = por %p107, %p108
      %p111 = scmp.ne.s32.totalorder %s96, %s110
      %p112 = scmp.eq.s32.totalorder %s23, 0
      %p113 = por %p111, %p112
      %s115 = sadd.s32 %s114, 1
      %p118 = scmp.eq.s32.totalorder %s17, 1
      %p119 = scmp.ne.s32.totalorder %s114, %s116
      %p120 = scmp.eq.s32.totalorder %s17, 0
      %p121 = por %p119, %p120
      %p122 = scmp.ne.s32.totalorder %s114, %s116
      %p123 = scmp.eq.s32.totalorder %s22, 1
      %p124 = por %p122, %p123
      %p125 = scmp.ne.s32.totalorder %s116, %s117
      %p126 = scmp.eq.s32.totalorder %s22, 0
      %p127 = por %p125, %p126
      %p128 = scmp.ne.s32.totalorder %s116, %s117
      %p129 = scmp.eq.s32.totalorder %s23, 1
      %p130 = por %p128, %p129
      %p132 = scmp.ne.s32.totalorder %s117, %s131
      %p133 = scmp.eq.s32.totalorder %s23, 0
      %p134 = por %p132, %p133
      %s136 = sadd.s32 %s135, 1
      %p139 = scmp.eq.s32.totalorder %s17, 1
      %p140 = scmp.ne.s32.totalorder %s135, %s137
      %p141 = scmp.eq.s32.totalorder %s17, 0
      %p142 = por %p140, %p141
      %p143 = scmp.ne.s32.totalorder %s135, %s137
      %p144 = scmp.eq.s32.totalorder %s22, 1
      %p145 = por %p143, %p144
      %p146 = scmp.ne.s32.totalorder %s137, %s138
      %p147 = scmp.eq.s32.totalorder %s22, 0
      %p148 = por %p146, %p147
      %p149 = scmp.ne.s32.totalorder %s137, %s138
      %p150 = scmp.eq.s32.totalorder %s23, 1
      %p151 = por %p149, %p150
      %p153 = scmp.ne.s32.totalorder %s138, %s152
      %p154 = scmp.eq.s32.totalorder %s23, 0
      %p155 = por %p153, %p154
      %s157 = sadd.s32 %s156, 1
      %p160 = scmp.eq.s32.totalorder %s17, 1
      %p161 = scmp.ne.s32.totalorder %s156, %s158
      %p162 = scmp.eq.s32.totalorder %s17, 0
      %p163 = por %p161, %p162
      %p164 = scmp.ne.s32.totalorder %s156, %s158
      %p165 = scmp.eq.s32.totalorder %s22, 1
      %p166 = por %p164, %p165
      %p167 = scmp.ne.s32.totalorder %s158, %s159
      %p168 = scmp.eq.s32.totalorder %s22, 0
      %p169 = por %p167, %p168
      %p170 = scmp.ne.s32.totalorder %s158, %s159
      %p171 = scmp.eq.s32.totalorder %s23, 1
      %p172 = por %p170, %p171
      %p174 = scmp.ne.s32.totalorder %s159, %s173
      %p175 = scmp.eq.s32.totalorder %s23, 0
      %p176 = por %p174, %p175
      %s177 = ssub.s32 %s17, %s24
      %p178 = scmp.eq.s32.totalorder %s177, 0
      %s180 = sadd.s32 %s179, 1
      %s181 = scalar_select %p178, %s179, %s180
      %p184 = pneg %p178
      %p185 = scmp.eq.s32.totalorder %s17, 1
      %p186 = por %p184, %p185
      %p187 = scmp.ne.s32.totalorder %s179, %s182
      %p188 = scmp.eq.s32.totalorder %s17, 0
      %p189 = por %p187, %p188
      %p190 = scmp.ne.s32.totalorder %s179, %s182
      %p191 = scmp.eq.s32.totalorder %s22, 1
      %p192 = por %p190, %p191
      %p193 = scmp.ne.s32.totalorder %s182, %s183
      %p194 = scmp.eq.s32.totalorder %s22, 0
      %p195 = por %p193, %p194
      %p196 = scmp.ne.s32.totalorder %s182, %s183
      %p197 = scmp.eq.s32.totalorder %s23, 1
      %p198 = por %p196, %p197
      %p200 = scmp.ne.s32.totalorder %s183, %s199
      %p201 = scmp.eq.s32.totalorder %s23, 0
      %p202 = por %p200, %p201
      %p203 = scmp.le.s32.totalorder 1, %s17
      %p204 = scmp.lt.s32.totalorder %s17, 3
      %p205 = pnand %p203, %p204
      %p206 = pneg %p205
      // Predicated region
      $region9: #{tpu_custom_call.1} parent=5 // pred_check
        _
      $region10: #{tpu_custom_call.1} parent=5 // pred_check_branch
        %208 = sbr.rel (%p205) target = $region12
      $region11: #{tpu_custom_call.1} parent=5 // pred_region
        %s209 = ssub.s32 %s17, 1
        // Predicated region
        $region13: #{tpu_custom_call.1} parent=11 // pred_check
          %p210 = pneg %p64
        $region14: #{tpu_custom_call.1} parent=11 // pred_check_branch
          %212 = sbr.rel (%p210) target = $region16
        $region15: #{tpu_custom_call.1} parent=11 // pred_region
          _
        $region16: #{tpu_custom_call.1} parent=11 // pred_fallthru
          _
        // Predicated region
        $region17: #{tpu_custom_call.1} parent=11 // pred_check
          %p213 = pneg %p85
        $region18: #{tpu_custom_call.1} parent=11 // pred_check_branch
          %215 = sbr.rel (%p213) target = $region20
        $region19: #{tpu_custom_call.1} parent=11 // pred_region
          _
        $region20: #{tpu_custom_call.1} parent=11 // pred_fallthru
          _
        // Predicated region
        $region21: #{tpu_custom_call.1} parent=11 // pred_check
          %p216 = pneg %p106
        $region22: #{tpu_custom_call.1} parent=11 // pred_check_branch
          %218 = sbr.rel (%p216) target = $region24
        $region23: #{tpu_custom_call.1} parent=11 // pred_region
          %s220 = ssub.s32 2048, 2048
          %221 = vsyncadd [#allocation5], %s220
          %s222 = sshll.u32 [#allocation4], 4
          %s223 = int_to_ptr.vmem [resolvable:$true] %s222
          %228 = dma.hbm_to_vmem [thread:$0]  %s3, 2048, %s223, [#allocation5], 64, 64, 4
        $region24: #{tpu_custom_call.1} parent=11 // pred_fallthru
          _
        // Predicated region
        $region25: #{tpu_custom_call.1} parent=11 // pred_check
          %p229 = pneg %p127
        $region26: #{tpu_custom_call.1} parent=11 // pred_check_branch
          %231 = sbr.rel (%p229) target = $region28
        $region27: #{tpu_custom_call.1} parent=11 // pred_region
          _
        $region28: #{tpu_custom_call.1} parent=11 // pred_fallthru
          _
        // Predicated region
        $region29: #{tpu_custom_call.1} parent=11 // pred_check
          %p232 = pneg %p148
        $region30: #{tpu_custom_call.1} parent=11 // pred_check_branch
          %234 = sbr.rel (%p232) target = $region32
        $region31: #{tpu_custom_call.1} parent=11 // pred_region
          _
        $region32: #{tpu_custom_call.1} parent=11 // pred_fallthru
          _
        // Predicated region
        $region33: #{tpu_custom_call.1} parent=11 // pred_check
          %p235 = pneg %p169
        $region34: #{tpu_custom_call.1} parent=11 // pred_check_branch
          %237 = sbr.rel (%p235) target = $region36
        $region35: #{tpu_custom_call.1} parent=11 // pred_region
          _
        $region36: #{tpu_custom_call.1} parent=11 // pred_fallthru
          _
      $region12: #{tpu_custom_call.1} parent=5 // pred_fallthru
        _
      %p238 = scmp.lt.s32.totalorder %s17, 2
      // Predicated region
      $region37: #{tpu_custom_call.1} parent=5 // pred_check
        %p239 = pneg %p238
      $region38: #{tpu_custom_call.1} parent=5 // pred_check_branch
        %241 = sbr.rel (%p239) target = $region40
      $region39: #{tpu_custom_call.1} parent=5 // pred_region
        // Predicated region
        $region41: #{tpu_custom_call.1} parent=39 // pred_check
          %p242 = pneg %p37
        $region42: #{tpu_custom_call.1} parent=39 // pred_check_branch
          %244 = sbr.rel (%p242) target = $region44
        $region43: #{tpu_custom_call.1} parent=39 // pred_region
          %s245 = sand.u32 %s27, 1
          %s246 = scalar_lea.sflag [#allocation3], %s245
          %s247 = sand.u32 %s27, 1
          %s248 = smul.addr %s247, 16
          %s249 = scalar_lea.vmem [#allocation2], %s248
          %s250 = smul.u32 2, %s17
          %s252 = ssub.s32 256, 256
          %253 = vsyncadd %s246, %s252
          %s254 = smul.addr %s250, 128
          %s255 = scalar_lea.hbm %s0, %s254
          %s256 = sshll.u32 %s249, 4
          %s257 = int_to_ptr.vmem [resolvable:$true] %s256
          %262 = dma.hbm_to_vmem [thread:$0]  %s255, 256, %s257, %s246, 128, 128, 8
        $region44: #{tpu_custom_call.1} parent=39 // pred_fallthru
          _
      $region40: #{tpu_custom_call.1} parent=5 // pred_fallthru
        _
      %p263 = scmp.le.s32.totalorder 1, %s17
      %p264 = scmp.lt.s32.totalorder %s17, 3
      %p265 = pnand %p263, %p264
      %p266 = pneg %p265
      // Predicated region
      $region45: #{tpu_custom_call.1} parent=5 // pred_check
        _
      $region46: #{tpu_custom_call.1} parent=5 // pred_check_branch
        %268 = sbr.rel (%p265) target = $region48
      $region47: #{tpu_custom_call.1} parent=5 // pred_region
        %s269 = ssub.s32 %s17, 1
        %s270 = sand.u32 %s30, 1
        %s271 = scalar_lea.sflag [#allocation3], %s270
        %s272 = sand.u32 %s30, 1
        %s273 = smul.addr %s272, 16
        %s274 = scalar_lea.vmem [#allocation2], %s273
        // Predicated region
        $region49: #{tpu_custom_call.1} parent=47 // pred_check
          %p275 = pneg %p43
        $region50: #{tpu_custom_call.1} parent=47 // pred_check_branch
          %277 = sbr.rel (%p275) target = $region52
        $region51: #{tpu_custom_call.1} parent=47 // pred_region
          %278 = dma.done %s271, 256
        $region52: #{tpu_custom_call.1} parent=47 // pred_fallthru
          _
        // Predicated region
        $region53: #{tpu_custom_call.1} parent=47 // pred_check
          %p279 = pneg %p106
        $region54: #{tpu_custom_call.1} parent=47 // pred_check_branch
          %281 = sbr.rel (%p279) target = $region56
        $region55: #{tpu_custom_call.1} parent=47 // pred_region
          %282 = dma.done [#allocation5], 2048
        $region56: #{tpu_custom_call.1} parent=47 // pred_fallthru
          _
        %s283 = sand.u32 %s30, 1
        %s284 = scalar_lea.sflag [#allocation3], %s283
        %s285 = sand.u32 %s30, 1
        %s286 = smul.addr %s285, 16
        %s287 = scalar_lea.vmem [#allocation2], %s286
        %p288 = pneg %p43
        %p289 = pneg %p40
        %p290 = pneg %p64
        %p291 = pneg %p61
        %p292 = pneg %p85
        %p293 = pneg %p82
        %p294 = pneg %p106
        %p295 = pneg %p103
        %p296 = pneg %p127
        %p297 = pneg %p124
        %p298 = pneg %p148
        %p299 = pneg %p145
        %p300 = pneg %p169
        %p301 = pneg %p166
        %p302 = pneg %p195
        %p303 = pneg %p192
        %s304 = smul.u32 2, %s22
        %p305 = scmp.lt.s32.totalorder %s304, 3
        %s306 = scalar_select %p305, %s304, 3
        %s307 = smul.addr %s306, 8
        %s308 = scalar_lea.vmem %s7, %s307
        %s309 = smul.u32 2, %s22
        %s310 = smul.u32 2, %s22
        %p311 = scmp.lt.s32.totalorder %s310, 3
        %s312 = scalar_select %p311, %s310, 3
        %s313 = smul.addr %s312, 8
        %s314 = scalar_lea.vmem %s7, %s313
        %s315 = smul.u32 2, %s22
        %v317 = vld [vmem:[%s274] sm:$0xff]
        %v318 = vld [vmem:[%s274 + $0x8] sm:$0xff]
        %v319 = vpack.c.bf16 %v318, %v317
        %v320 = vld [vmem:[%s1] sm:$0xff]
        %v321 = vld [vmem:[%s1 + $0x8] sm:$0xff]
        %v322 = vld [vmem:[%s1 + $0x10] sm:$0xff]
        %v323 = vld [vmem:[%s1 + $0x18] sm:$0xff]
        %v324 = vld [vmem:[%s1 + $0x20] sm:$0xff]
        %v325 = vld [vmem:[%s1 + $0x28] sm:$0xff]
        %v326 = vld [vmem:[%s1 + $0x30] sm:$0xff]
        %v327 = vld [vmem:[%s1 + $0x38] sm:$0xff]
        %v328 = vld [vmem:[%s2] sm:$0x3]
        %v330 = vlaneseq
        %v331 = vshrl.u32 %v330, 7
        %v332 = vsub.s32 0, %v331
        %v333 = vrot.slane %v328, %v332
        %v334 = vlaneseq
        %v335 = vshrl.u32 %v334, 7
        %v336 = vsub.s32 1, %v335
        %v337 = vrot.slane %v328, %v336
        %v348 = vunpack.c.l.b16 %v320
        %v349 = vunpack.c.h.b16 %v320
        %v350 = vunpack.c.l.b16 %v321
        %v351 = vunpack.c.h.b16 %v321
        %v352 = vunpack.c.l.b16 %v322
        %v353 = vunpack.c.h.b16 %v322
        %v354 = vunpack.c.l.b16 %v323
        %v355 = vunpack.c.h.b16 %v323
        %v356 = vunpack.c.l.b16 %v324
        %v357 = vunpack.c.h.b16 %v324
        %v358 = vunpack.c.l.b16 %v325
        %v359 = vunpack.c.h.b16 %v325
        %v360 = vunpack.c.l.b16 %v326
        %v361 = vunpack.c.h.b16 %v326
        %v362 = vunpack.c.l.b16 %v327
        %v363 = vunpack.c.h.b16 %v327
        %v364 = vpack.c.b16 %v350, %v348
        %v365 = vpack.c.b16 %v351, %v349
        %v366 = vpack.c.b16 %v354, %v352
        %v367 = vpack.c.b16 %v355, %v353
        %v368 = vpack.c.b16 %v358, %v356
        %v369 = vpack.c.b16 %v359, %v357
        %v370 = vpack.c.b16 %v362, %v360
        %v371 = vpack.c.b16 %v363, %v361
        %vm380 = vcmask 523264
        %v382 = vsel %vm380, %v319, 0
        %384 = vmatprep.subr.bf16.mxu0 %v365
        %385 = vmatpush1.bf16.msra.mxu0 %v364
        %386 = vmatprep.subr.bf16.mxu0 %v367
        %387 = vmatpush1.bf16.msra.mxu0 %v366
        %388 = vmatprep.subr.bf16.mxu0 %v369
        %389 = vmatpush1.bf16.msra.mxu0 %v368
        %390 = vmatprep.subr.bf16.mxu0 %v371
        %391 = vmatpush1.bf16.msra.mxu0 %v370
        %392 = vmatprep.subr.bf16.mxu0 0
        %393 = vmatpush1.bf16.msra.mxu0 0
        %394 = vmatprep.subr.bf16.mxu0 0
        %395 = vmatpush1.bf16.msra.mxu0 0
        %396 = vmatprep.subr.bf16.mxu0 0
        %397 = vmatpush1.bf16.msra.mxu0 0
        %398 = vmatprep.subr.bf16.mxu0 0
        %399 = vmatpush1.bf16.msra.mxu0 0
        %400 = vmatprep.subr.bf16.mxu0 0
        %401 = vmatpush1.bf16.msra.mxu0 0
        %402 = vmatprep.subr.bf16.mxu0 0
        %403 = vmatpush1.bf16.msra.mxu0 0
        %404 = vmatprep.subr.bf16.mxu0 0
        %405 = vmatpush1.bf16.msra.mxu0 0
        %406 = vmatprep.subr.bf16.mxu0 0
        %407 = vmatpush1.bf16.msra.mxu0 0
        %408 = vmatprep.subr.bf16.mxu0 0
        %409 = vmatpush1.bf16.msra.mxu0 0
        %410 = vmatprep.subr.bf16.mxu0 0
        %411 = vmatpush1.bf16.msra.mxu0 0
        %412 = vmatprep.subr.bf16.mxu0 0
        %413 = vmatpush1.bf16.msra.mxu0 0
        %414 = vmatprep.subr.bf16.mxu0 0
        %415 = vmatpush1.bf16.msra.mxu0 0
        %416 = vmatprep.mubr.bf16.mxu0 0
        %417 = vmatmul.mubr.bf16.gmra.mrb[0].mxu0 %v382
        %v418 = vpop.f32.mrb[0].mxu0
        %v419 = vadd.f32 %v333, %v418
        %v420 = vpop.f32.mrb[0].mxu0
        %v421 = vadd.f32 %v337, %v420
        %v422 = vpop.f32.mrb[0].mxu0
        %v423 = vadd.f32 %v333, %v422
        %v424 = vpop.f32.mrb[0].mxu0
        %v425 = vadd.f32 %v337, %v424
        %426 = vdwg.mxu0
        %v427 = vmax.f32 %v419, 0.0
        %v428 = vmax.f32 %v421, 0.0
        %v429 = vmax.f32 %v423, 0.0
        %v430 = vmax.f32 %v425, 0.0
        %v431 = vpack.c.bf16 %v429, %v427
        %v432 = vpack.c.bf16 %v430, %v428
        %v433 = vld [vmem:[#allocation4] sm:$0xf]
        %v434 = vld [vmem:[#allocation4 + $0x4] sm:$0xf]
        %v435 = vld [vmem:[#allocation4 + $0x8] sm:$0xf]
        %v436 = vld [vmem:[#allocation4 + $0xc] sm:$0xf]
        %v437 = vld [vmem:[#allocation4 + $0x10] sm:$0xf]
        %v438 = vld [vmem:[#allocation4 + $0x14] sm:$0xf]
        %v439 = vld [vmem:[#allocation4 + $0x18] sm:$0xf]
        %v440 = vld [vmem:[#allocation4 + $0x1c] sm:$0xf]
        %v441 = vld [vmem:[#allocation4 + $0x20] sm:$0xf]
        %v442 = vld [vmem:[#allocation4 + $0x24] sm:$0xf]
        %v443 = vld [vmem:[#allocation4 + $0x28] sm:$0xf]
        %v444 = vld [vmem:[#allocation4 + $0x2c] sm:$0xf]
        %v445 = vld [vmem:[#allocation4 + $0x30] sm:$0xf]
        %v446 = vld [vmem:[#allocation4 + $0x34] sm:$0xf]
        %v447 = vld [vmem:[#allocation4 + $0x38] sm:$0xf]
        %v448 = vld [vmem:[#allocation4 + $0x3c] sm:$0xf]
        %v449 = vld [vmem:[#allocation4 + $0x40] sm:$0xf]
        %v450 = vld [vmem:[#allocation4 + $0x44] sm:$0xf]
        %v451 = vld [vmem:[#allocation4 + $0x48] sm:$0xf]
        %v452 = vld [vmem:[#allocation4 + $0x4c] sm:$0xf]
        %v453 = vld [vmem:[#allocation4 + $0x50] sm:$0xf]
        %v454 = vld [vmem:[#allocation4 + $0x54] sm:$0xf]
        %v455 = vld [vmem:[#allocation4 + $0x58] sm:$0xf]
        %v456 = vld [vmem:[#allocation4 + $0x5c] sm:$0xf]
        %v457 = vld [vmem:[#allocation4 + $0x60] sm:$0xf]
        %v458 = vld [vmem:[#allocation4 + $0x64] sm:$0xf]
        %v459 = vld [vmem:[#allocation4 + $0x68] sm:$0xf]
        %v460 = vld [vmem:[#allocation4 + $0x6c] sm:$0xf]
        %v461 = vld [vmem:[#allocation4 + $0x70] sm:$0xf]
        %v462 = vld [vmem:[#allocation4 + $0x74] sm:$0xf]
        %v463 = vld [vmem:[#allocation4 + $0x78] sm:$0xf]
        %v464 = vld [vmem:[#allocation4 + $0x7c] sm:$0xf]
        %v465 = vld [vmem:[%s4] sm:$0x1]
        %v467 = vlaneseq
        %v468 = vshrl.u32 %v467, 7
        %v469 = vsub.s32 0, %v468
        %v470 = vrot.slane %v465, %v469
        %v504 = vunpack.c.l.b16 %v433
        %v505 = vunpack.c.l.b16 %v434
        %v506 = vunpack.c.l.b16 %v435
        %v507 = vunpack.c.l.b16 %v436
        %v508 = vunpack.c.l.b16 %v437
        %v509 = vunpack.c.l.b16 %v438
        %v510 = vunpack.c.l.b16 %v439
        %v511 = vunpack.c.l.b16 %v440
        %v512 = vunpack.c.l.b16 %v441
        %v513 = vunpack.c.l.b16 %v442
        %v514 = vunpack.c.l.b16 %v443
        %v515 = vunpack.c.l.b16 %v444
        %v516 = vunpack.c.l.b16 %v445
        %v517 = vunpack.c.l.b16 %v446
        %v518 = vunpack.c.l.b16 %v447
        %v519 = vunpack.c.l.b16 %v448
        %v520 = vunpack.c.l.b16 %v449
        %v521 = vunpack.c.l.b16 %v450
        %v522 = vunpack.c.l.b16 %v451
        %v523 = vunpack.c.l.b16 %v452
        %v524 = vunpack.c.l.b16 %v453
        %v525 = vunpack.c.l.b16 %v454
        %v526 = vunpack.c.l.b16 %v455
        %v527 = vunpack.c.l.b16 %v456
        %v528 = vunpack.c.l.b16 %v457
        %v529 = vunpack.c.l.b16 %v458
        %v530 = vunpack.c.l.b16 %v459
        %v531 = vunpack.c.l.b16 %v460
        %v532 = vunpack.c.l.b16 %v461
        %v533 = vunpack.c.l.b16 %v462
        %v534 = vunpack.c.l.b16 %v463
        %v535 = vunpack.c.l.b16 %v464
        %v536 = vpack.c.b16 %v505, %v504
        %v537 = vpack.c.b16 %v507, %v506
        %v538 = vpack.c.b16 %v509, %v508
        %v539 = vpack.c.b16 %v511, %v510
        %v540 = vpack.c.b16 %v513, %v512
        %v541 = vpack.c.b16 %v515, %v514
        %v542 = vpack.c.b16 %v517, %v516
        %v543 = vpack.c.b16 %v519, %v518
        %v544 = vpack.c.b16 %v521, %v520
        %v545 = vpack.c.b16 %v523, %v522
        %v546 = vpack.c.b16 %v525, %v524
        %v547 = vpack.c.b16 %v527, %v526
        %v548 = vpack.c.b16 %v529, %v528
        %v549 = vpack.c.b16 %v531, %v530
        %v550 = vpack.c.b16 %v533, %v532
        %v551 = vpack.c.b16 %v535, %v534
        %568 = vmatprep.subr.bf16.mxu0 0
        %569 = vmatpush1.bf16.msra.mxu0 %v536
        %570 = vmatprep.subr.bf16.mxu0 0
        %571 = vmatpush1.bf16.msra.mxu0 %v537
        %572 = vmatprep.subr.bf16.mxu0 0
        %573 = vmatpush1.bf16.msra.mxu0 %v538
        %574 = vmatprep.subr.bf16.mxu0 0
        %575 = vmatpush1.bf16.msra.mxu0 %v539
        %576 = vmatprep.subr.bf16.mxu0 0
        %577 = vmatpush1.bf16.msra.mxu0 %v540
        %578 = vmatprep.subr.bf16.mxu0 0
        %579 = vmatpush1.bf16.msra.mxu0 %v541
        %580 = vmatprep.subr.bf16.mxu0 0
        %581 = vmatpush1.bf16.msra.mxu0 %v542
        %582 = vmatprep.subr.bf16.mxu0 0
        %583 = vmatpush1.bf16.msra.mxu0 %v543
        %584 = vmatprep.subr.bf16.mxu0 0
        %585 = vmatpush1.bf16.msra.mxu0 %v544
        %586 = vmatprep.subr.bf16.mxu0 0
        %587 = vmatpush1.bf16.msra.mxu0 %v545
        %588 = vmatprep.subr.bf16.mxu0 0
        %589 = vmatpush1.bf16.msra.mxu0 %v546
        %590 = vmatprep.subr.bf16.mxu0 0
        %591 = vmatpush1.bf16.msra.mxu0 %v547
        %592 = vmatprep.subr.bf16.mxu0 0
        %593 = vmatpush1.bf16.msra.mxu0 %v548
        %594 = vmatprep.subr.bf16.mxu0 0
        %595 = vmatpush1.bf16.msra.mxu0 %v549
        %596 = vmatprep.subr.bf16.mxu0 0
        %597 = vmatpush1.bf16.msra.mxu0 %v550
        %598 = vmatprep.subr.bf16.mxu0 0
        %599 = vmatpush1.bf16.msra.mxu0 %v551
        %600 = vmatprep.mubr.bf16.mxu0 %v432
        %601 = vmatmul.mubr.bf16.gmra.mrb[0].mxu0 %v431
        %v602 = vpop.f32.mrb[0].mxu0
        %v603 = vadd.f32 %v470, %v602
        %v604 = vpop.f32.mrb[0].mxu0
        %v605 = vpop.f32.mrb[0].mxu0
        %v606 = vadd.f32 %v470, %v605
        %v607 = vpop.f32.mrb[0].mxu0
        %608 = vdwg.mxu0
        %v609 = vmax.f32 %v603, 0.0
        %v610 = vmax.f32 %v606, 0.0
        %v611 = vpack.c.bf16 %v610, %v609
        %v612 = vld [vmem:[%s5] sm:$0xf]
        %v613 = vld [vmem:[%s5 + $0x4] sm:$0xf]
        %v614 = vld [vmem:[%s5 + $0x8] sm:$0xf]
        %v615 = vld [vmem:[%s5 + $0xc] sm:$0xf]
        %v616 = vld [vmem:[%s5 + $0x10] sm:$0xf]
        %v617 = vld [vmem:[%s5 + $0x14] sm:$0xf]
        %v618 = vld [vmem:[%s5 + $0x18] sm:$0xf]
        %v619 = vld [vmem:[%s5 + $0x1c] sm:$0xf]
        %v620 = vld [vmem:[%s5 + $0x20] sm:$0xf]
        %v621 = vld [vmem:[%s5 + $0x24] sm:$0xf]
        %v622 = vld [vmem:[%s5 + $0x28] sm:$0xf]
        %v623 = vld [vmem:[%s5 + $0x2c] sm:$0xf]
        %v624 = vld [vmem:[%s5 + $0x30] sm:$0xf]
        %v625 = vld [vmem:[%s5 + $0x34] sm:$0xf]
        %v626 = vld [vmem:[%s5 + $0x38] sm:$0xf]
        %v627 = vld [vmem:[%s5 + $0x3c] sm:$0xf]
        %v628 = vld [vmem:[%s6] sm:$0x1]
        %v630 = vlaneseq
        %v631 = vshrl.u32 %v630, 7
        %v632 = vsub.s32 0, %v631
        %v633 = vrot.slane %v628, %v632
        %v651 = vunpack.c.l.b16 %v612
        %v652 = vunpack.c.l.b16 %v613
        %v653 = vunpack.c.l.b16 %v614
        %v654 = vunpack.c.l.b16 %v615
        %v655 = vunpack.c.l.b16 %v616
        %v656 = vunpack.c.l.b16 %v617
        %v657 = vunpack.c.l.b16 %v618
        %v658 = vunpack.c.l.b16 %v619
        %v659 = vunpack.c.l.b16 %v620
        %v660 = vunpack.c.l.b16 %v621
        %v661 = vunpack.c.l.b16 %v622
        %v662 = vunpack.c.l.b16 %v623
        %v663 = vunpack.c.l.b16 %v624
        %v664 = vunpack.c.l.b16 %v625
        %v665 = vunpack.c.l.b16 %v626
        %v666 = vunpack.c.l.b16 %v627
        %v667 = vpack.c.b16 %v652, %v651
        %v668 = vpack.c.b16 %v654, %v653
        %v669 = vpack.c.b16 %v656, %v655
        %v670 = vpack.c.b16 %v658, %v657
        %v671 = vpack.c.b16 %v660, %v659
        %v672 = vpack.c.b16 %v662, %v661
        %v673 = vpack.c.b16 %v664, %v663
        %v674 = vpack.c.b16 %v666, %v665
        %683 = vmatprep.subr.bf16.mxu0 0
        %684 = vmatpush1.bf16.msra.mxu0 %v667
        %685 = vmatprep.subr.bf16.mxu0 0
        %686 = vmatpush1.bf16.msra.mxu0 %v668
        %687 = vmatprep.subr.bf16.mxu0 0
        %688 = vmatpush1.bf16.msra.mxu0 %v669
        %689 = vmatprep.subr.bf16.mxu0 0
        %690 = vmatpush1.bf16.msra.mxu0 %v670
        %691 = vmatprep.subr.bf16.mxu0 0
        %692 = vmatpush1.bf16.msra.mxu0 %v671
        %693 = vmatprep.subr.bf16.mxu0 0
        %694 = vmatpush1.bf16.msra.mxu0 %v672
        %695 = vmatprep.subr.bf16.mxu0 0
        %696 = vmatpush1.bf16.msra.mxu0 %v673
        %697 = vmatprep.subr.bf16.mxu0 0
        %698 = vmatpush1.bf16.msra.mxu0 %v674
        %699 = vmatprep.subr.bf16.mxu0 0
        %700 = vmatpush1.bf16.msra.mxu0 0
        %701 = vmatprep.subr.bf16.mxu0 0
        %702 = vmatpush1.bf16.msra.mxu0 0
        %703 = vmatprep.subr.bf16.mxu0 0
        %704 = vmatpush1.bf16.msra.mxu0 0
        %705 = vmatprep.subr.bf16.mxu0 0
        %706 = vmatpush1.bf16.msra.mxu0 0
        %707 = vmatprep.subr.bf16.mxu0 0
        %708 = vmatpush1.bf16.msra.mxu0 0
        %709 = vmatprep.subr.bf16.mxu0 0
        %710 = vmatpush1.bf16.msra.mxu0 0
        %711 = vmatprep.subr.bf16.mxu0 0
        %712 = vmatpush1.bf16.msra.mxu0 0
        %713 = vmatprep.subr.bf16.mxu0 0
        %714 = vmatpush1.bf16.msra.mxu0 0
        %715 = vmatprep.mubr.bf16.mxu0 0
        %716 = vmatmul.mubr.bf16.gmra.mrb[0].mxu0 %v611
        %v717 = vpop.f32.mrb[0].mxu0
        %v718 = vadd.f32 %v633, %v717
        %v719 = vpop.f32.mrb[0].mxu0
        %v720 = vpop.f32.mrb[0].mxu0
        %v721 = vadd.f32 %v633, %v720
        %v722 = vpop.f32.mrb[0].mxu0
        %723 = vdwg.mxu0
        %vm724 = vcmask 31744
        %725 = vst.msk [vmem:[%s314] sm:$0xff] %vm724, %v718
        %726 = vst.msk [vmem:[%s314 + $0x8] sm:$0xff] %vm724, %v721
        %s727 = smul.u32 2, %s22
        %p728 = scmp.lt.s32.totalorder %s727, 3
        %s729 = scalar_select %p728, %s727, 3
        %s730 = smul.addr %s729, 8
        %s731 = scalar_lea.vmem %s7, %s730
        // Predicated region
        $region57: #{tpu_custom_call.1} parent=47 // pred_check
          %p732 = pneg %p192
        $region58: #{tpu_custom_call.1} parent=47 // pred_check_branch
          %734 = sbr.rel (%p732) target = $region60
        $region59: #{tpu_custom_call.1} parent=47 // pred_region
          %s735 = smul.u32 2, %s22
        $region60: #{tpu_custom_call.1} parent=47 // pred_fallthru
          _
      $region48: #{tpu_custom_call.1} parent=5 // pred_fallthru
        _
      %p736 = scmp.le.s32.totalorder 2, %s17
      // Predicated region
      $region61: #{tpu_custom_call.1} parent=5 // pred_check
        %p737 = pneg %p736
      $region62: #{tpu_custom_call.1} parent=5 // pred_check_branch
        %739 = sbr.rel (%p737) target = $region64
      $region63: #{tpu_custom_call.1} parent=5 // pred_region
        %s740 = ssub.s32 %s17, 2
        // Predicated region
        $region65: #{tpu_custom_call.1} parent=63 // pred_check
          %p741 = pneg %p198
        $region66: #{tpu_custom_call.1} parent=63 // pred_check_branch
          %743 = sbr.rel (%p741) target = $region68
        $region67: #{tpu_custom_call.1} parent=63 // pred_region
          %s744 = smul.u32 2, %s23
          %p745 = scmp.lt.s32.totalorder %s744, 3
          %s746 = scalar_select %p745, %s744, 3
          %s747 = smul.addr %s746, 8
          %s748 = scalar_lea.vmem %s7, %s747
        $region68: #{tpu_custom_call.1} parent=63 // pred_fallthru
          _
      $region64: #{tpu_custom_call.1} parent=5 // pred_fallthru
        _
    $region6: #{tpu_custom_call.1} parent=1 // loop_footer
      %s21 = sadd.s32 1, %s17
    $region7: #{tpu_custom_call.1} parent=1 // loop_footer_branch
      %16 = sbr.rel target = $region3
    $region8: #{tpu_custom_call.1} parent=1 // loop_exit
      _
    %749 = vsyncpa [#allocation3], 1
    %s750 = scalar_lea.sflag [#allocation3], 1
    %751 = vsyncpa %s750, 1
    %752 = vsyncpa [#allocation5], 1

</llo_original>
